<compile_context>
chip_gen: v5e
topology: v5e:2x2
jax: 0.10.0
libtpu: 0.0.40
codegen_flags: <defaults>
</compile_context>

<pallas_src>
import functools

import jax
import jax.numpy as jnp
import numpy as np
from jax.experimental import pallas as pl
from jax.experimental.pallas import tpu as pltpu


def _build_pos_table(max_len: int, d_model: int) -> np.ndarray:
    # Exactly the reference construction.
    pos_table = np.array(
        [
            [pos / np.power(10000, 2 * i / d_model) for i in range(d_model)]
            if pos != 0
            else np.zeros(d_model)
            for pos in range(max_len)
        ]
    )
    pos_table[1:, 0::2] = np.sin(pos_table[1:, 0::2])
    pos_table[1:, 1::2] = np.cos(pos_table[1:, 1::2])
    return pos_table.astype(np.float32)


def _choose_seq_tile(batch, seq_len, d_model, itemsize,
                     target_bytes=4 << 20, min_steps=4):
    """Sequence-tile rows St such that:
       - St divides seq_len and is a multiple of the sublane pack (8 for 4-byte,
         16 for 2-byte, 32 for 1-byte dtypes), or St == seq_len (full extent);
       - the (B, St, D) x-tile stays around `target_bytes`;
       - the grid keeps >= `min_steps` steps when possible (v7x: 2 TCs +
         double buffering)."""
    mult = 8 if itemsize >= 4 else (16 if itemsize == 2 else 32)
    if seq_len % mult != 0:
        # Full-extent block is always legal.
        # TODO(synk): pad seq_len in the caller if this single tile overflows VMEM.
        return seq_len
    max_rows = max(mult, target_bytes // max(1, batch * d_model * itemsize))
    st = min(seq_len, (max_rows // mult) * mult)
    st = max(st, mult)
    # Keep at least `min_steps` grid steps when the sequence allows it.
    cap = (seq_len // min_steps) // mult * mult
    if cap >= mult:
        st = min(st, cap)
    while seq_len % st != 0:
        st -= mult
    return st


def _fmix32(h):
    """murmur3 finalizer: u32 mixer fallback when the HW PRNG is unavailable."""
    h = h ^ (h >> 16)
    h = h * jnp.uint32(0x85EBCA6B)
    h = h ^ (h >> 13)
    h = h * jnp.uint32(0xC2B2AE35)
    h = h ^ (h >> 16)
    return h


def _posenc_kernel(x_ref, pos_ref, out_ref, *, p, training, seed,
                   seq_tile, seq_len, use_hw_prng):
    # x_ref/out_ref: (B, St, D) VMEM tiles; pos_ref: (St, D) positional slice
    # (already in the input dtype).
    x = x_ref[...]
    y = x + pos_ref[...][None, :, :]

    apply_dropout = bool(training) and p > 0.0
    if apply_dropout and p >= 1.0:
        out_ref[...] = jnp.zeros(out_ref.shape, out_ref.dtype)
        return

    if apply_dropout:
        nb, st, d = y.shape
        # Static 31-bit integer threshold: drop iff top-31 uniform < thr31.
        thr31 = min(int(round(p * (1 << 31))), (1 << 31) - 1)
        scale = jnp.asarray(1.0 / (1.0 - p), dtype=y.dtype)

        if use_hw_prng:
            # Deterministic per-grid-step seed -> reproducible and order-free
            # (grid axis stays "parallel" for v7x megacore sharding).
            pltpu.prng_seed(jnp.int32(seed & 0x7FFFFFFF)
                            + pl.program_id(0) * jnp.int32(1000003))
            bits = pltpu.bitcast(pltpu.prng_random_bits((nb, st, d)),
                                 jnp.uint32)
        else:
            # Software counter hash (interpret / non-TPU fallback only).
            # NOTE: global index wraps mod 2^32 for >4.29e9-element inputs
            # (statistically harmless).
            row0 = (pl.program_id(0) * seq_tile).astype(jnp.uint32)
            b_i = jax.lax.broadcasted_iota(jnp.uint32, (nb, st, d), 0)
            r_i = jax.lax.broadcasted_iota(jnp.uint32, (nb, st, d), 1)
            c_i = jax.lax.broadcasted_iota(jnp.uint32, (nb, st, d), 2)
            gidx = (b_i * jnp.uint32(seq_len) + row0 + r_i) * jnp.uint32(d) + c_i
            bits = _fmix32(gidx * jnp.uint32(0x9E3779B1)
                           + jnp.uint32(seed & 0xFFFFFFFF))

        keep = (bits >> jnp.uint32(1)).astype(jnp.int32) >= jnp.int32(thr31)
        y = jnp.where(keep, y * scale, jnp.zeros_like(y))

    out_ref[...] = y.astype(out_ref.dtype)


def positional_encoding(enc_inputs, pos_table, *, p=0.1, training=True,
                        seed=0, use_hw_prng=None, target_tile_bytes=4 << 20):
    """enc_inputs: [B, S, D]; pos_table: [max_len, D] (float32)."""
    B, S, D = enc_inputs.shape
    dtype = enc_inputs.dtype
    itemsize = jnp.dtype(dtype).itemsize

    # Static slice + cast outside the kernel (halves pos traffic for bf16,
    # avoids per-element converts inside the kernel).
    pos_slice = pos_table[:S, :].astype(dtype)

    if use_hw_prng is None:
        use_hw_prng = jax.devices()[0].platform == "tpu"

    st = _choose_seq_tile(B, S, D, itemsize, target_bytes=target_tile_bytes)
    grid = (pl.cdiv(S, st),)

    # Explicit scoped-VMEM budget: double-buffered x + out tiles plus the pos
    # tile, with slack.  Covers v5e's 16 MiB default; modest vs. v7x's 64 MiB.
    x_tile_bytes = B * st * D * itemsize
    pos_tile_bytes = st * D * itemsize
    needed = 2 * (2 * x_tile_bytes + pos_tile_bytes) + (2 << 20)
    vmem_limit = int(max(needed, 32 << 20))

    kernel = functools.partial(
        _posenc_kernel, p=float(p), training=bool(training), seed=int(seed),
        seq_tile=st, seq_len=S, use_hw_prng=bool(use_hw_prng))

    bytes_accessed = (2 * B * S * D + S * D) * itemsize

    return pl.pallas_call(
        kernel,
        out_shape=jax.ShapeDtypeStruct((B, S, D), dtype),
        grid=grid,
        in_specs=[
            pl.BlockSpec((B, st, D), lambda j: (0, j, 0)),
            pl.BlockSpec((st, D), lambda j: (j, 0)),
        ],
        out_specs=pl.BlockSpec((B, st, D), lambda j: (0, j, 0)),
        compiler_params=pltpu.CompilerParams(
            dimension_semantics=("parallel",),
            vmem_limit_bytes=vmem_limit,
        ),
        cost_estimate=pl.CostEstimate(
            flops=2 * B * S * D,
            transcendentals=0,
            bytes_accessed=int(bytes_accessed),
        ),
    )(enc_inputs, pos_slice)


if __name__ == "__main__":
    # Small shapes consistent with the module's forward: [batch, seq, d_model]
    B, S, D = 2, 8, 128
    MAX_LEN = 16
    P = 0.1

    key = jax.random.PRNGKey(0)
    x = jax.random.normal(key, (B, S, D), dtype=jnp.float32)
    pos_table = jnp.asarray(_build_pos_table(MAX_LEN, D))
    ref = np.asarray(x) + np.asarray(pos_table)[:S][None, :, :]

    # Eval-mode forward (dropout identity) — must match pure reference.
    out_eval = jax.block_until_ready(
        positional_encoding(x, pos_table, p=P, training=False))
    np.testing.assert_allclose(np.asarray(out_eval), ref, rtol=1e-6, atol=1e-6)

    # Training-mode forward (inverted dropout, deterministic seed).
    out_train = jax.block_until_ready(
        positional_encoding(x, pos_table, p=P, training=True, seed=0))
    out_train2 = jax.block_until_ready(
        positional_encoding(x, pos_table, p=P, training=True, seed=0))
    np.testing.assert_array_equal(np.asarray(out_train), np.asarray(out_train2))

    o = np.asarray(out_train)
    kept = o != 0.0
    # Kept elements are exactly (x + pos) / (1 - p); dropped are 0.
    np.testing.assert_allclose(o[kept], (ref / (1.0 - P))[kept],
                               rtol=1e-5, atol=1e-5)
    keep_rate = float(kept.mean())
    assert 0.8 < keep_rate <= 1.0, keep_rate

    assert out_train.shape == (B, S, D) and out_train.dtype == jnp.float32
    print("KERNEL_OK")
</pallas_src>

<mosaic_0001>
module attributes {stable_mosaic.version = 11 : i64} {
  func.func @_posenc_kernel(%arg0: i32, %arg1: memref<2x8x128xf32, #tpu.memory_space<vmem>>, %arg2: memref<8x128xf32, #tpu.memory_space<vmem>>, %arg3: memref<2x8x128xf32, #tpu.memory_space<vmem>>) attributes {dimension_semantics = [#tpu.dimension_semantics<parallel>], iteration_bounds = array<i64: 1>, scalar_prefetch = 0 : i64, scratch_operands = 0 : i64, tpu.core_type = #tpu.core_type<tc>, window_params = [{transform_indices = @transform_0, window_bounds = array<i64: 2, 8, 128>}, {transform_indices = @transform_1, window_bounds = array<i64: 8, 128>}, {transform_indices = @transform_2, window_bounds = array<i64: 2, 8, 128>}]} {
    %c0 = arith.constant 0 : index
    %c0_0 = arith.constant 0 : index
    %c0_1 = arith.constant 0 : index
    %0 = vector.load %arg1[%c0, %c0_0, %c0_1] : memref<2x8x128xf32, #tpu.memory_space<vmem>>, vector<2x8x128xf32>
    %c0_2 = arith.constant 0 : index
    %c0_3 = arith.constant 0 : index
    %1 = vector.load %arg2[%c0_2, %c0_3] : memref<8x128xf32, #tpu.memory_space<vmem>>, vector<8x128xf32>
    %2 = vector.shape_cast %1 : vector<8x128xf32> to vector<1x8x128xf32>
    %3 = vector.broadcast %2 : vector<1x8x128xf32> to vector<2x8x128xf32>
    %4 = arith.addf %0, %3 : vector<2x8x128xf32>
    %c0_4 = arith.constant 0 : index
    %c0_5 = arith.constant 0 : index
    %c0_6 = arith.constant 0 : index
    %5 = vector.load %arg3[%c0_4, %c0_5, %c0_6] : memref<2x8x128xf32, #tpu.memory_space<vmem>>, vector<2x8x128xf32>
    tpu.vector_store %arg3[%c0_4, %c0_5, %c0_6], %4 {strides = array<i32>} : memref<2x8x128xf32, #tpu.memory_space<vmem>>, vector<2x8x128xf32>,
    return
  }
  func.func @transform_0(%arg0: i32) -> (i32, i32, i32) {
    %c0_i32 = arith.constant 0 : i32
    %c0_i32_0 = arith.constant 0 : i32
    %c0_i32_1 = arith.constant 0 : i32
    return %c0_i32, %arg0, %c0_i32_0 : i32, i32, i32
  }
  func.func @transform_1(%arg0: i32) -> (i32, i32) {
    %c0_i32 = arith.constant 0 : i32
    %c0_i32_0 = arith.constant 0 : i32
    return %arg0, %c0_i32 : i32, i32
  }
  func.func @transform_2(%arg0: i32) -> (i32, i32, i32) {
    %c0_i32 = arith.constant 0 : i32
    %c0_i32_0 = arith.constant 0 : i32
    %c0_i32_1 = arith.constant 0 : i32
    return %c0_i32, %arg0, %c0_i32_0 : i32, i32, i32
  }
}

</mosaic_0001>

<llo_original>
// kernel: tpu_custom_call.1
$region0: #{tpu_custom_call.1}
  #allocation0 [shape = 'u32[]', space=smem, size = 0x4, offset = 0x4, fixed_abs, tag = 'smem constant byte address 0x4 - core index']
  #allocation1 [shape = 'u32[72,128]{1,0:T(1,128)}', space=vmem, size = 0x9000, scoped, tag = 'internal scratch']
  %s0 = inlined_call_operand.hbm [shape: f32[2,8,128], index: 0, kind: input, shape index: {}]
  %s1 = inlined_call_operand.hbm [shape: f32[8,128], index: 1, kind: input, shape index: {}]
  %s2 = inlined_call_operand.hbm [shape: f32[2,8,128], index: 2, kind: output, shape index: {}]
  %s3 = sld [smem:[#allocation0]]
  $region26: #{tpu_custom_call.1} parent=0
    _
  %s5 = ssub.s32 1, %s3
  %s6 = scalar_select 0, %s5, %s3
  $region1: #{tpu_custom_call.1} parent=0
    #allocation2 [shape = 'u8[8192]{0}', space=vmem, size = 0x2000, scoped, tag = 'input window, operand 0, single buffered']
    #allocation3 [shape = 's32[1]{0}', space=sflag, size = 0x4, scoped, tag = 'scoped memory for tpu_custom_call.1']
    #allocation4 [shape = 's32[1]{0}', space=sflag, size = 0x4, scoped, tag = 'scoped memory for tpu_custom_call.1']
    #allocation5 [shape = 'u8[4096]{0}', space=vmem, size = 0x1000, scoped, tag = 'input window, operand 1, single buffered']
    #allocation6 [shape = 's32[1]{0}', space=sflag, size = 0x4, scoped, tag = 'scoped memory for tpu_custom_call.1']
    #allocation7 [shape = 'u8[8192]{0}', space=vmem, size = 0x2000, scoped, tag = 'output window, operand 0, single buffered']
    %7 = vsyncpa [#allocation3], 0
    %8 = vsyncpa [#allocation6], 0
    %9 = vsyncpa [#allocation4], 0
    // Predicated region
    $region2: #{tpu_custom_call.1} parent=1 // pred_check
      _
    $region3: #{tpu_custom_call.1} parent=1 // pred_check_branch
      %11 = sbr.rel (0) target = $region5
    $region4: #{tpu_custom_call.1} parent=1 // pred_region
      %13 = vsyncadd [#allocation3], 0
      %s14 = sshll.u32 %s0, 4
      %s15 = int_to_ptr.hbm [resolvable:$true] %s14
      %s16 = sshll.u32 [#allocation2], 4
      %s17 = int_to_ptr.vmem [resolvable:$true] %s16
      %22 = dma.hbm_to_vmem [thread:$0]  %s15, 256, %s17, [#allocation3], 128, 128, 8
    $region5: #{tpu_custom_call.1} parent=1 // pred_fallthru
      _
    // Predicated region
    $region6: #{tpu_custom_call.1} parent=1 // pred_check
      _
    $region7: #{tpu_custom_call.1} parent=1 // pred_check_branch
      %24 = sbr.rel (0) target = $region9
    $region8: #{tpu_custom_call.1} parent=1 // pred_region
      %26 = vsyncadd [#allocation6], 0
      %s28 = sshll.u32 %s1, 4
      %s29 = int_to_ptr.hbm [resolvable:$true] %s28
      %s30 = sshll.u32 [#allocation5], 4
      %s31 = int_to_ptr.vmem [resolvable:$true] %s30
      %33 = dma.hbm_to_vmem [thread:$0]  %s29, 128, %s31, [#allocation6]
    $region9: #{tpu_custom_call.1} parent=1 // pred_fallthru
      _
    // Predicated region
    $region10: #{tpu_custom_call.1} parent=1 // pred_check
      _
    $region11: #{tpu_custom_call.1} parent=1 // pred_check_branch
      %35 = sbr.rel (0) target = $region13
    $region12: #{tpu_custom_call.1} parent=1 // pred_region
      %37 = dma.done [#allocation3], 256
    $region13: #{tpu_custom_call.1} parent=1 // pred_fallthru
      _
    // Predicated region
    $region14: #{tpu_custom_call.1} parent=1 // pred_check
      _
    $region15: #{tpu_custom_call.1} parent=1 // pred_check_branch
      %39 = sbr.rel (0) target = $region17
    $region16: #{tpu_custom_call.1} parent=1 // pred_region
      %41 = dma.done [#allocation6], 128
    $region17: #{tpu_custom_call.1} parent=1 // pred_fallthru
      _
    %v42 = vld [vmem:[#allocation2] sm:$0xff]
    %v43 = vld [vmem:[#allocation2 + $0x8] sm:$0xff]
    %v44 = vld [vmem:[#allocation5] sm:$0xff]
    %v45 = vadd.f32 %v42, %v44
    %v46 = vadd.f32 %v43, %v44
    %47 = vst [vmem:[#allocation7] sm:$0xff] %v45
    %48 = vst [vmem:[#allocation7 + $0x8] sm:$0xff] %v46
    // Predicated region
    $region18: #{tpu_custom_call.1} parent=1 // pred_check
      _
    $region19: #{tpu_custom_call.1} parent=1 // pred_check_branch
      %50 = sbr.rel (0) target = $region21
    $region20: #{tpu_custom_call.1} parent=1 // pred_region
      %52 = vsyncadd [#allocation4], 0
      %s53 = sshll.u32 [#allocation7], 4
      %s54 = int_to_ptr.vmem [resolvable:$true] %s53
      %s55 = sshll.u32 %s2, 4
      %s56 = int_to_ptr.hbm [resolvable:$true] %s55
      %61 = dma.vmem_to_hbm [thread:$0]  %s54, 256, %s56, [#allocation4], 128, 128, 8
    $region21: #{tpu_custom_call.1} parent=1 // pred_fallthru
      _
    // Predicated region
    $region22: #{tpu_custom_call.1} parent=1 // pred_check
      _
    $region23: #{tpu_custom_call.1} parent=1 // pred_check_branch
      %63 = sbr.rel (0) target = $region25
    $region24: #{tpu_custom_call.1} parent=1 // pred_region
      %65 = dma.done [#allocation4], 256
    $region25: #{tpu_custom_call.1} parent=1 // pred_fallthru
      _
    %66 = vsyncpa [#allocation3], 1
    %67 = vsyncpa [#allocation6], 1
    %68 = vsyncpa [#allocation4], 1

</llo_original>
